<compile_context>
chip_gen: v7x
topology: tpu7x:2x2x1
jax: 0.10.0
libtpu: 0.0.40
codegen_flags: <defaults>
</compile_context>

<pallas_src>
import functools

import jax
import jax.numpy as jnp
from jax.experimental import pallas as pl
from jax.experimental.pallas import tpu as pltpu


# ------------------------------- helpers ----------------------------------- #

def _round_up(v, m):
    return ((v + m - 1) // m) * m


def _pick_block_n(n, max_bn=32):
    """Batch tile: full batch if small, else a multiple-of-8 divisor of N."""
    if n <= max_bn:
        return n
    for bn in range(max_bn - (max_bn % 8), 7, -8):   # multiples of 8, descending
        if n % bn == 0:
            return bn
    return n                                         # fallback: no batch tiling


# ----------------------------- fused Pallas kernel -------------------------- #

def two_head_kernel(x_ref, wt_ref, bt_ref,
                    w01_ref, b01_ref,
                    g1_ref, be1_ref,
                    w2_ref, b2_ref, g2_ref, be2_ref,
                    w3_ref, b3_ref,
                    logits_ref, aux_ref,
                    fet_ref,
                    *, num_blocks, block_n, nc_pad):
    i = pl.program_id(0)

    # ---------------- base: 1x1 conv + ReLU + global average pool -----------
    x = x_ref[...]                                # (bn, C, HW), HW lane-dense
    wt = wt_ref[...].astype(jnp.float32)          # (F, C)  transposed conv weight
    bt = bt_ref[...].astype(jnp.float32)          # (F, 1)
    bn, C, HW = x.shape
    F = wt.shape[0]

    acc = jnp.broadcast_to(bt[None], (bn, F, HW))            # bias term
    for c in range(C):                                        # static unroll (C small)
        acc = acc + x[:, c:c + 1, :] * wt[:, c:c + 1][None]   # VPU fma, lane-dense
    acc = jnp.maximum(acc, 0.0)                               # ReLU
    fet_block = jnp.mean(acc, axis=-1)                        # global avg pool (bn, F)

    if num_blocks == 1:
        fet_ref[...] = fet_block
    else:
        start = pl.multiple_of(i * block_n, block_n)          # block_n % 8 == 0 here
        fet_ref[pl.ds(start, block_n), :] = fet_block

    # ---------------- heads: run once, on the last grid step ----------------
    @pl.when(i == num_blocks - 1)
    def _():
        eps = 1e-5
        f = fet_ref[...]                                      # (N, F) f32, full batch

        # self.fc and aux Linear #1 share the LHS -> one fused MXU matmul.
        y01 = jnp.dot(f, w01_ref[...], preferred_element_type=jnp.float32) + b01_ref[...]
        logits_ref[...] = y01[:, :nc_pad].astype(logits_ref.dtype)
        h = y01[:, nc_pad:]                                   # (N, FQ) aux hidden

        def bn_lrelu(v, gamma, beta):
            mu = jnp.mean(v, axis=0, keepdims=True)
            var = jnp.mean((v - mu) ** 2, axis=0, keepdims=True)   # biased var (PyTorch BN)
            vn = (v - mu) * jax.lax.rsqrt(var + eps) * gamma + beta
            return jnp.where(vn > 0, vn, 0.1 * vn)                 # LeakyReLU(0.1)

        h = bn_lrelu(h, g1_ref[...], be1_ref[...])
        h = jnp.dot(h, w2_ref[...], preferred_element_type=jnp.float32) + b2_ref[...]
        h = bn_lrelu(h, g2_ref[...], be2_ref[...])
        aux_ref[...] = (jnp.dot(h, w3_ref[...], preferred_element_type=jnp.float32)
                        + b3_ref[...]).astype(aux_ref.dtype)


# ------------------------------ JAX wrapper --------------------------------- #

def two_head_forward(x_nchw, params):
    N, C, H, W = x_nchw.shape
    HW = H * W
    x = x_nchw.reshape(N, C, HW)                  # free reshape, NO transpose

    F = params["w_base"].shape[1]
    num_class = params["wfc"].shape[1]
    fq = params["w1"].shape[1]
    P = _round_up(num_class, 128)                 # lane-dense head outputs
    FQ = _round_up(fq, 128)                       # lane-dense aux hidden dim
    f32 = jnp.float32

    def pad_cols(a, t):
        return jnp.pad(a.astype(f32), ((0, 0), (0, t - a.shape[1])))

    def pad_rows(a, t):
        return jnp.pad(a.astype(f32), ((0, t - a.shape[0]), (0, 0)))

    # Base weights: (C,F)->(F,C), bias ->(F,1) so F sits on sublanes and HW on
    # lanes inside the kernel (no in-kernel relayout).
    wt = params["w_base"].astype(f32).T                       # (F, C)
    bt = params["b_base"].astype(f32).reshape(F, 1)           # (F, 1)

    # Heads: fuse fc + aux-linear-1 weights (shared LHS); zero-pad to 128 lanes.
    w01 = jnp.concatenate([pad_cols(params["wfc"], P), pad_cols(params["w1"], FQ)], axis=1)
    b01 = jnp.concatenate([pad_cols(params["bfc"], P), pad_cols(params["b1"], FQ)], axis=1)
    g1p, be1p = pad_cols(params["g1"], FQ), pad_cols(params["be1"], FQ)
    w2p = pad_rows(pad_cols(params["w2"], FQ), FQ)
    b2p, g2p, be2p = (pad_cols(params["b2"], FQ), pad_cols(params["g2"], FQ),
                      pad_cols(params["be2"], FQ))
    w3p = pad_rows(pad_cols(params["w3"], P), FQ)
    b3p = pad_cols(params["b3"], P)

    block_n = _pick_block_n(N)
    num_blocks = N // block_n

    kernel = functools.partial(two_head_kernel, num_blocks=num_blocks,
                               block_n=block_n, nc_pad=P)

    def full(arr):
        return pl.BlockSpec(arr.shape, lambda i, _nd=arr.ndim: (0,) * _nd)

    in_specs = [pl.BlockSpec((block_n, C, HW), lambda i: (i, 0, 0)),
                full(wt), full(bt), full(w01), full(b01),
                full(g1p), full(be1p), full(w2p), full(b2p), full(g2p), full(be2p),
                full(w3p), full(b3p)]
    out_specs = (pl.BlockSpec((N, P), lambda i: (0, 0)),
                 pl.BlockSpec((N, P), lambda i: (0, 0)))

    flops = int(2 * N * HW * C * F + 2 * N * F * (P + FQ)
                + 2 * N * FQ * FQ + 2 * N * FQ * P)
    weights = (wt, bt, w01, b01, g1p, be1p, w2p, b2p, g2p, be2p, w3p, b3p)
    bytes_accessed = int(x.size * x.dtype.itemsize
                         + sum(4 * w.size for w in weights)
                         + 2 * N * P * 4)

    logits_p, aux_p = pl.pallas_call(
        kernel,
        out_shape=(jax.ShapeDtypeStruct((N, P), f32),
                   jax.ShapeDtypeStruct((N, P), f32)),
        grid_spec=pltpu.PrefetchScalarGridSpec(
            num_scalar_prefetch=0,
            grid=(num_blocks,),
            in_specs=in_specs,
            out_specs=out_specs,
            scratch_shapes=[pltpu.VMEM((N, F), f32)],   # full-batch features
        ),
        compiler_params=pltpu.CompilerParams(
            # "arbitrary": fet scratch carries across batch blocks and the
            # heads (full-batch BatchNorm) run on the last step.
            dimension_semantics=("arbitrary",),
            vmem_limit_bytes=32 * 1024 * 1024,
        ),
        cost_estimate=pl.CostEstimate(flops=flops, transcendentals=int(2 * FQ),
                                      bytes_accessed=bytes_accessed),
    )(x, wt, bt, w01, b01, g1p, be1p, w2p, b2p, g2p, be2p, w3p, b3p)

    return logits_p[:, :num_class], aux_p[:, :num_class]   # training-mode return


# ---------------------------- pure-JAX reference ---------------------------- #

def reference_forward(x_nchw, params):
    N, C, H, W = x_nchw.shape
    x = jnp.transpose(x_nchw, (0, 2, 3, 1)).reshape(N, H * W, C).astype(jnp.float32)
    y = jnp.einsum("npc,cf->npf", x, params["w_base"]) + params["b_base"][None]
    fet = jnp.mean(jnp.maximum(y, 0.0), axis=1)

    logits = fet @ params["wfc"] + params["bfc"]

    def bn_lrelu(h, g, b):
        mu = jnp.mean(h, axis=0, keepdims=True)
        var = jnp.mean((h - mu) ** 2, axis=0, keepdims=True)
        hn = (h - mu) / jnp.sqrt(var + 1e-5) * g + b
        return jnp.where(hn > 0, hn, 0.1 * hn)

    h = bn_lrelu(fet @ params["w1"] + params["b1"], params["g1"], params["be1"])
    h = bn_lrelu(h @ params["w2"] + params["b2"], params["g2"], params["be2"])
    aux = h @ params["w3"] + params["b3"]
    return logits, aux


# ----------------------------------- main ----------------------------------- #

def init_params(key, in_ch, fet_dim, num_class):
    fq = fet_dim // 4
    ks = jax.random.split(key, 12)

    def lin(k, fin, fout):
        scale = 1.0 / jnp.sqrt(fin)
        return jax.random.uniform(k, (fin, fout), jnp.float32, -scale, scale)

    return {
        "w_base": lin(ks[0], in_ch, fet_dim),
        "b_base": jax.random.uniform(ks[1], (1, fet_dim), jnp.float32, -0.1, 0.1),
        "wfc": lin(ks[2], fet_dim, num_class),
        "bfc": jax.random.uniform(ks[3], (1, num_class), jnp.float32, -0.1, 0.1),
        "w1": lin(ks[4], fet_dim, fq),
        "b1": jax.random.uniform(ks[5], (1, fq), jnp.float32, -0.1, 0.1),
        "g1": jnp.ones((1, fq), jnp.float32),
        "be1": jnp.zeros((1, fq), jnp.float32),
        "w2": lin(ks[6], fq, fq),
        "b2": jax.random.uniform(ks[7], (1, fq), jnp.float32, -0.1, 0.1),
        "g2": jnp.ones((1, fq), jnp.float32),
        "be2": jnp.zeros((1, fq), jnp.float32),
        "w3": lin(ks[8], fq, num_class),
        "b3": jax.random.uniform(ks[9], (1, num_class), jnp.float32, -0.1, 0.1),
    }


if __name__ == "__main__":
    N, C, H, W = 2, 4, 16, 16
    fet_dim, num_class = 32, 10

    key = jax.random.PRNGKey(0)
    kx, kp = jax.random.split(key)
    x = jax.random.normal(kx, (N, C, H, W), jnp.float32)      # PyTorch NCHW input
    params = init_params(kp, C, fet_dim, num_class)

    fwd = jax.jit(two_head_forward)
    logits, logits_aux = jax.block_until_ready(fwd(x, params))

    ref_logits, ref_aux = reference_forward(x, params)
    assert logits.shape == (N, num_class) and logits_aux.shape == (N, num_class)
    assert jnp.allclose(logits, ref_logits, atol=1e-4, rtol=1e-4)
    assert jnp.allclose(logits_aux, ref_aux, atol=1e-4, rtol=1e-4)

    print("KERNEL_OK")
</pallas_src>

<mosaic_0001>
module attributes {stable_mosaic.version = 11 : i64} {
  func.func @two_head_kernel(%arg0: i32, %arg1: memref<2x4x256xf32, #tpu.memory_space<vmem>>, %arg2: memref<32x4xf32, #tpu.memory_space<vmem>>, %arg3: memref<32x1xf32, #tpu.memory_space<vmem>>, %arg4: memref<32x256xf32, #tpu.memory_space<vmem>>, %arg5: memref<1x256xf32, #tpu.memory_space<vmem>>, %arg6: memref<1x128xf32, #tpu.memory_space<vmem>>, %arg7: memref<1x128xf32, #tpu.memory_space<vmem>>, %arg8: memref<128x128xf32, #tpu.memory_space<vmem>>, %arg9: memref<1x128xf32, #tpu.memory_space<vmem>>, %arg10: memref<1x128xf32, #tpu.memory_space<vmem>>, %arg11: memref<1x128xf32, #tpu.memory_space<vmem>>, %arg12: memref<128x128xf32, #tpu.memory_space<vmem>>, %arg13: memref<1x128xf32, #tpu.memory_space<vmem>>, %arg14: memref<2x128xf32, #tpu.memory_space<vmem>>, %arg15: memref<2x128xf32, #tpu.memory_space<vmem>>, %arg16: memref<2x32xf32, #tpu.memory_space<vmem>>) attributes {dimension_semantics = [#tpu.dimension_semantics<arbitrary>], iteration_bounds = array<i64: 1>, scalar_prefetch = 0 : i64, scratch_operands = 1 : i64, tpu.core_type = #tpu.core_type<tc>, window_params = [{transform_indices = @transform_0, window_bounds = array<i64: 2, 4, 256>}, {pipeline_mode = #tpu.pipeline_mode<synchronous>, transform_indices = @transform_1, window_bounds = array<i64: 32, 4>}, {pipeline_mode = #tpu.pipeline_mode<synchronous>, transform_indices = @transform_2, window_bounds = array<i64: 32, 1>}, {pipeline_mode = #tpu.pipeline_mode<synchronous>, transform_indices = @transform_3, window_bounds = array<i64: 32, 256>}, {pipeline_mode = #tpu.pipeline_mode<synchronous>, transform_indices = @transform_4, window_bounds = array<i64: 1, 256>}, {pipeline_mode = #tpu.pipeline_mode<synchronous>, transform_indices = @transform_5, window_bounds = array<i64: 1, 128>}, {pipeline_mode = #tpu.pipeline_mode<synchronous>, transform_indices = @transform_6, window_bounds = array<i64: 1, 128>}, {pipeline_mode = #tpu.pipeline_mode<synchronous>, transform_indices = @transform_7, window_bounds = array<i64: 128, 128>}, {pipeline_mode = #tpu.pipeline_mode<synchronous>, transform_indices = @transform_8, window_bounds = array<i64: 1, 128>}, {pipeline_mode = #tpu.pipeline_mode<synchronous>, transform_indices = @transform_9, window_bounds = array<i64: 1, 128>}, {pipeline_mode = #tpu.pipeline_mode<synchronous>, transform_indices = @transform_10, window_bounds = array<i64: 1, 128>}, {pipeline_mode = #tpu.pipeline_mode<synchronous>, transform_indices = @transform_11, window_bounds = array<i64: 128, 128>}, {pipeline_mode = #tpu.pipeline_mode<synchronous>, transform_indices = @transform_12, window_bounds = array<i64: 1, 128>}, {pipeline_mode = #tpu.pipeline_mode<synchronous>, transform_indices = @transform_13, window_bounds = array<i64: 2, 128>}, {pipeline_mode = #tpu.pipeline_mode<synchronous>, transform_indices = @transform_14, window_bounds = array<i64: 2, 128>}]} {
    %c0 = arith.constant 0 : index
    %c0_0 = arith.constant 0 : index
    %c0_1 = arith.constant 0 : index
    %0 = vector.load %arg1[%c0, %c0_0, %c0_1] : memref<2x4x256xf32, #tpu.memory_space<vmem>>, vector<2x4x256xf32>
    %c0_2 = arith.constant 0 : index
    %c0_3 = arith.constant 0 : index
    %1 = vector.load %arg2[%c0_2, %c0_3] : memref<32x4xf32, #tpu.memory_space<vmem>>, vector<32x4xf32>
    %c0_4 = arith.constant 0 : index
    %c0_5 = arith.constant 0 : index
    %2 = vector.load %arg3[%c0_4, %c0_5] : memref<32x1xf32, #tpu.memory_space<vmem>>, vector<32x1xf32>
    %3 = vector.shape_cast %2 : vector<32x1xf32> to vector<1x32x1xf32>
    %4 = vector.shape_cast %3 : vector<1x32x1xf32> to vector<1x32x1xf32>
    %5 = vector.broadcast %4 : vector<1x32x1xf32> to vector<2x32x256xf32>
    %6 = vector.extract_strided_slice %0 {offsets = [0, 0, 0], sizes = [2, 1, 256], strides = [1, 1, 1]} : vector<2x4x256xf32> to vector<2x1x256xf32>
    %7 = vector.extract_strided_slice %1 {offsets = [0, 0], sizes = [32, 1], strides = [1, 1]} : vector<32x4xf32> to vector<32x1xf32>
    %8 = vector.shape_cast %7 : vector<32x1xf32> to vector<1x32x1xf32>
    %9 = vector.broadcast %6 : vector<2x1x256xf32> to vector<2x32x256xf32>
    %10 = vector.broadcast %8 : vector<1x32x1xf32> to vector<2x32x256xf32>
    %11 = arith.mulf %9, %10 : vector<2x32x256xf32>
    %12 = arith.addf %5, %11 : vector<2x32x256xf32>
    %13 = vector.extract_strided_slice %0 {offsets = [0, 1, 0], sizes = [2, 1, 256], strides = [1, 1, 1]} : vector<2x4x256xf32> to vector<2x1x256xf32>
    %14 = vector.extract_strided_slice %1 {offsets = [0, 1], sizes = [32, 1], strides = [1, 1]} : vector<32x4xf32> to vector<32x1xf32>
    %15 = vector.shape_cast %14 : vector<32x1xf32> to vector<1x32x1xf32>
    %16 = vector.broadcast %13 : vector<2x1x256xf32> to vector<2x32x256xf32>
    %17 = vector.broadcast %15 : vector<1x32x1xf32> to vector<2x32x256xf32>
    %18 = arith.mulf %16, %17 : vector<2x32x256xf32>
    %19 = arith.addf %12, %18 : vector<2x32x256xf32>
    %20 = vector.extract_strided_slice %0 {offsets = [0, 2, 0], sizes = [2, 1, 256], strides = [1, 1, 1]} : vector<2x4x256xf32> to vector<2x1x256xf32>
    %21 = vector.extract_strided_slice %1 {offsets = [0, 2], sizes = [32, 1], strides = [1, 1]} : vector<32x4xf32> to vector<32x1xf32>
    %22 = vector.shape_cast %21 : vector<32x1xf32> to vector<1x32x1xf32>
    %23 = vector.broadcast %20 : vector<2x1x256xf32> to vector<2x32x256xf32>
    %24 = vector.broadcast %22 : vector<1x32x1xf32> to vector<2x32x256xf32>
    %25 = arith.mulf %23, %24 : vector<2x32x256xf32>
    %26 = arith.addf %19, %25 : vector<2x32x256xf32>
    %27 = vector.extract_strided_slice %0 {offsets = [0, 3, 0], sizes = [2, 1, 256], strides = [1, 1, 1]} : vector<2x4x256xf32> to vector<2x1x256xf32>
    %28 = vector.extract_strided_slice %1 {offsets = [0, 3], sizes = [32, 1], strides = [1, 1]} : vector<32x4xf32> to vector<32x1xf32>
    %29 = vector.shape_cast %28 : vector<32x1xf32> to vector<1x32x1xf32>
    %30 = vector.broadcast %27 : vector<2x1x256xf32> to vector<2x32x256xf32>
    %31 = vector.broadcast %29 : vector<1x32x1xf32> to vector<2x32x256xf32>
    %32 = arith.mulf %30, %31 : vector<2x32x256xf32>
    %33 = arith.addf %26, %32 : vector<2x32x256xf32>
    %cst = arith.constant 0.000000e+00 : f32
    %34 = vector.broadcast %cst : f32 to vector<2x32x256xf32>
    %35 = arith.maximumf %33, %34 : vector<2x32x256xf32>
    %cst_6 = arith.constant dense<0.000000e+00> : vector<2x32xf32>
    %36 = vector.multi_reduction <add>, %35, %cst_6 [2] : vector<2x32x256xf32> to vector<2x32xf32>
    %cst_7 = arith.constant 2.560000e+02 : f32
    %37 = vector.broadcast %cst_7 : f32 to vector<2x32xf32>
    %38 = arith.divf %36, %37 : vector<2x32xf32>
    %c0_8 = arith.constant 0 : index
    %c0_9 = arith.constant 0 : index
    %39 = vector.load %arg16[%c0_8, %c0_9] : memref<2x32xf32, #tpu.memory_space<vmem>>, vector<2x32xf32>
    tpu.vector_store %arg16[%c0_8, %c0_9], %38 {strides = array<i32>} : memref<2x32xf32, #tpu.memory_space<vmem>>, vector<2x32xf32>,
    %c0_i32 = arith.constant 0 : i32
    %40 = arith.cmpi eq, %arg0, %c0_i32 : i32
    %41 = arith.extui %40 : i1 to i32
    %c0_i32_10 = arith.constant 0 : i32
    %42 = arith.cmpi ne, %41, %c0_i32_10 : i32
    scf.if %42 {
      %c0_11 = arith.constant 0 : index
      %c0_12 = arith.constant 0 : index
      %43 = vector.load %arg16[%c0_11, %c0_12] : memref<2x32xf32, #tpu.memory_space<vmem>>, vector<2x32xf32>
      %c0_13 = arith.constant 0 : index
      %c0_14 = arith.constant 0 : index
      %44 = vector.load %arg4[%c0_13, %c0_14] : memref<32x256xf32, #tpu.memory_space<vmem>>, vector<32x256xf32>
      %cst_15 = arith.constant dense<0.000000e+00> : vector<2x256xf32>
      %45 = tpu.matmul %43, %44, %cst_15 {dimension_numbers = #tpu.dot_dimension_numbers<[1], [0], [0], [1], [0, 0, 1, 1], [], []>} : vector<2x32xf32>, vector<32x256xf32>, vector<2x256xf32> -> vector<2x256xf32>
      %c0_16 = arith.constant 0 : index
      %c0_17 = arith.constant 0 : index
      %46 = vector.load %arg5[%c0_16, %c0_17] : memref<1x256xf32, #tpu.memory_space<vmem>>, vector<1x256xf32>
      %47 = vector.broadcast %46 : vector<1x256xf32> to vector<2x256xf32>
      %48 = arith.addf %45, %47 : vector<2x256xf32>
      %49 = vector.extract_strided_slice %48 {offsets = [0, 0], sizes = [2, 128], strides = [1, 1]} : vector<2x256xf32> to vector<2x128xf32>
      %c0_18 = arith.constant 0 : index
      %c0_19 = arith.constant 0 : index
      %50 = vector.load %arg14[%c0_18, %c0_19] : memref<2x128xf32, #tpu.memory_space<vmem>>, vector<2x128xf32>
      tpu.vector_store %arg14[%c0_18, %c0_19], %49 {strides = array<i32>} : memref<2x128xf32, #tpu.memory_space<vmem>>, vector<2x128xf32>,
      %51 = vector.extract_strided_slice %48 {offsets = [0, 128], sizes = [2, 128], strides = [1, 1]} : vector<2x256xf32> to vector<2x128xf32>
      %c0_20 = arith.constant 0 : index
      %c0_21 = arith.constant 0 : index
      %52 = vector.load %arg6[%c0_20, %c0_21] : memref<1x128xf32, #tpu.memory_space<vmem>>, vector<1x128xf32>
      %c0_22 = arith.constant 0 : index
      %c0_23 = arith.constant 0 : index
      %53 = vector.load %arg7[%c0_22, %c0_23] : memref<1x128xf32, #tpu.memory_space<vmem>>, vector<1x128xf32>
      %cst_24 = arith.constant dense<0.000000e+00> : vector<128xf32>
      %54 = vector.multi_reduction <add>, %51, %cst_24 [0] : vector<2x128xf32> to vector<128xf32>
      %55 = vector.shape_cast %54 : vector<128xf32> to vector<1x128xf32>
      %cst_25 = arith.constant 2.000000e+00 : f32
      %56 = vector.broadcast %cst_25 : f32 to vector<1x128xf32>
      %57 = arith.divf %55, %56 : vector<1x128xf32>
      %58 = vector.broadcast %57 : vector<1x128xf32> to vector<2x128xf32>
      %59 = arith.subf %51, %58 : vector<2x128xf32>
      %60 = arith.mulf %59, %59 : vector<2x128xf32>
      %cst_26 = arith.constant dense<0.000000e+00> : vector<128xf32>
      %61 = vector.multi_reduction <add>, %60, %cst_26 [0] : vector<2x128xf32> to vector<128xf32>
      %62 = vector.shape_cast %61 : vector<128xf32> to vector<1x128xf32>
      %cst_27 = arith.constant 2.000000e+00 : f32
      %63 = vector.broadcast %cst_27 : f32 to vector<1x128xf32>
      %64 = arith.divf %62, %63 : vector<1x128xf32>
      %65 = vector.broadcast %57 : vector<1x128xf32> to vector<2x128xf32>
      %66 = arith.subf %51, %65 : vector<2x128xf32>
      %cst_28 = arith.constant 9.99999974E-6 : f32
      %67 = vector.broadcast %cst_28 : f32 to vector<1x128xf32>
      %68 = arith.addf %64, %67 : vector<1x128xf32>
      %69 = math.rsqrt %68 : vector<1x128xf32>
      %70 = vector.broadcast %69 : vector<1x128xf32> to vector<2x128xf32>
      %71 = arith.mulf %66, %70 : vector<2x128xf32>
      %72 = vector.broadcast %52 : vector<1x128xf32> to vector<2x128xf32>
      %73 = arith.mulf %71, %72 : vector<2x128xf32>
      %74 = vector.broadcast %53 : vector<1x128xf32> to vector<2x128xf32>
      %75 = arith.addf %73, %74 : vector<2x128xf32>
      %cst_29 = arith.constant 0.000000e+00 : f32
      %76 = vector.broadcast %cst_29 : f32 to vector<2x128xf32>
      %77 = arith.cmpf ogt, %75, %76 : vector<2x128xf32>
      %cst_30 = arith.constant 1.000000e-01 : f32
      %78 = vector.broadcast %cst_30 : f32 to vector<2x128xf32>
      %79 = arith.mulf %78, %75 : vector<2x128xf32>
      %80 = arith.select %77, %75, %79 : vector<2x128xi1>, vector<2x128xf32>
      %c0_31 = arith.constant 0 : index
      %c0_32 = arith.constant 0 : index
      %81 = vector.load %arg8[%c0_31, %c0_32] : memref<128x128xf32, #tpu.memory_space<vmem>>, vector<128x128xf32>
      %cst_33 = arith.constant dense<0.000000e+00> : vector<2x128xf32>
      %82 = tpu.matmul %80, %81, %cst_33 {dimension_numbers = #tpu.dot_dimension_numbers<[1], [0], [0], [1], [0, 0, 1, 1], [], []>} : vector<2x128xf32>, vector<128x128xf32>, vector<2x128xf32> -> vector<2x128xf32>
      %c0_34 = arith.constant 0 : index
      %c0_35 = arith.constant 0 : index
      %83 = vector.load %arg9[%c0_34, %c0_35] : memref<1x128xf32, #tpu.memory_space<vmem>>, vector<1x128xf32>
      %84 = vector.broadcast %83 : vector<1x128xf32> to vector<2x128xf32>
      %85 = arith.addf %82, %84 : vector<2x128xf32>
      %c0_36 = arith.constant 0 : index
      %c0_37 = arith.constant 0 : index
      %86 = vector.load %arg10[%c0_36, %c0_37] : memref<1x128xf32, #tpu.memory_space<vmem>>, vector<1x128xf32>
      %c0_38 = arith.constant 0 : index
      %c0_39 = arith.constant 0 : index
      %87 = vector.load %arg11[%c0_38, %c0_39] : memref<1x128xf32, #tpu.memory_space<vmem>>, vector<1x128xf32>
      %cst_40 = arith.constant dense<0.000000e+00> : vector<128xf32>
      %88 = vector.multi_reduction <add>, %85, %cst_40 [0] : vector<2x128xf32> to vector<128xf32>
      %89 = vector.shape_cast %88 : vector<128xf32> to vector<1x128xf32>
      %cst_41 = arith.constant 2.000000e+00 : f32
      %90 = vector.broadcast %cst_41 : f32 to vector<1x128xf32>
      %91 = arith.divf %89, %90 : vector<1x128xf32>
      %92 = vector.broadcast %91 : vector<1x128xf32> to vector<2x128xf32>
      %93 = arith.subf %85, %92 : vector<2x128xf32>
      %94 = arith.mulf %93, %93 : vector<2x128xf32>
      %cst_42 = arith.constant dense<0.000000e+00> : vector<128xf32>
      %95 = vector.multi_reduction <add>, %94, %cst_42 [0] : vector<2x128xf32> to vector<128xf32>
      %96 = vector.shape_cast %95 : vector<128xf32> to vector<1x128xf32>
      %cst_43 = arith.constant 2.000000e+00 : f32
      %97 = vector.broadcast %cst_43 : f32 to vector<1x128xf32>
      %98 = arith.divf %96, %97 : vector<1x128xf32>
      %99 = vector.broadcast %91 : vector<1x128xf32> to vector<2x128xf32>
      %100 = arith.subf %85, %99 : vector<2x128xf32>
      %cst_44 = arith.constant 9.99999974E-6 : f32
      %101 = vector.broadcast %cst_44 : f32 to vector<1x128xf32>
      %102 = arith.addf %98, %101 : vector<1x128xf32>
      %103 = math.rsqrt %102 : vector<1x128xf32>
      %104 = vector.broadcast %103 : vector<1x128xf32> to vector<2x128xf32>
      %105 = arith.mulf %100, %104 : vector<2x128xf32>
      %106 = vector.broadcast %86 : vector<1x128xf32> to vector<2x128xf32>
      %107 = arith.mulf %105, %106 : vector<2x128xf32>
      %108 = vector.broadcast %87 : vector<1x128xf32> to vector<2x128xf32>
      %109 = arith.addf %107, %108 : vector<2x128xf32>
      %cst_45 = arith.constant 0.000000e+00 : f32
      %110 = vector.broadcast %cst_45 : f32 to vector<2x128xf32>
      %111 = arith.cmpf ogt, %109, %110 : vector<2x128xf32>
      %cst_46 = arith.constant 1.000000e-01 : f32
      %112 = vector.broadcast %cst_46 : f32 to vector<2x128xf32>
      %113 = arith.mulf %112, %109 : vector<2x128xf32>
      %114 = arith.select %111, %109, %113 : vector<2x128xi1>, vector<2x128xf32>
      %c0_47 = arith.constant 0 : index
      %c0_48 = arith.constant 0 : index
      %115 = vector.load %arg12[%c0_47, %c0_48] : memref<128x128xf32, #tpu.memory_space<vmem>>, vector<128x128xf32>
      %cst_49 = arith.constant dense<0.000000e+00> : vector<2x128xf32>
      %116 = tpu.matmul %114, %115, %cst_49 {dimension_numbers = #tpu.dot_dimension_numbers<[1], [0], [0], [1], [0, 0, 1, 1], [], []>} : vector<2x128xf32>, vector<128x128xf32>, vector<2x128xf32> -> vector<2x128xf32>
      %c0_50 = arith.constant 0 : index
      %c0_51 = arith.constant 0 : index
      %117 = vector.load %arg13[%c0_50, %c0_51] : memref<1x128xf32, #tpu.memory_space<vmem>>, vector<1x128xf32>
      %118 = vector.broadcast %117 : vector<1x128xf32> to vector<2x128xf32>
      %119 = arith.addf %116, %118 : vector<2x128xf32>
      %c0_52 = arith.constant 0 : index
      %c0_53 = arith.constant 0 : index
      %120 = vector.load %arg15[%c0_52, %c0_53] : memref<2x128xf32, #tpu.memory_space<vmem>>, vector<2x128xf32>
      tpu.vector_store %arg15[%c0_52, %c0_53], %119 {strides = array<i32>} : memref<2x128xf32, #tpu.memory_space<vmem>>, vector<2x128xf32>,
    } else {
    }
    return
  }
  func.func @transform_0(%arg0: i32) -> (i32, i32, i32) {
    %c0_i32 = arith.constant 0 : i32
    %c0_i32_0 = arith.constant 0 : i32
    %c0_i32_1 = arith.constant 0 : i32
    return %arg0, %c0_i32, %c0_i32_0 : i32, i32, i32
  }
  func.func @transform_1(%arg0: i32) -> (i32, i32) {
    %c0_i32 = arith.constant 0 : i32
    %c0_i32_0 = arith.constant 0 : i32
    %c0_i32_1 = arith.constant 0 : i32
    return %c0_i32, %c0_i32_0 : i32, i32
  }
  func.func @transform_2(%arg0: i32) -> (i32, i32) {
    %c0_i32 = arith.constant 0 : i32
    %c0_i32_0 = arith.constant 0 : i32
    %c0_i32_1 = arith.constant 0 : i32
    return %c0_i32, %c0_i32_0 : i32, i32
  }
  func.func @transform_3(%arg0: i32) -> (i32, i32) {
    %c0_i32 = arith.constant 0 : i32
    %c0_i32_0 = arith.constant 0 : i32
    %c0_i32_1 = arith.constant 0 : i32
    return %c0_i32, %c0_i32_0 : i32, i32
  }
  func.func @transform_4(%arg0: i32) -> (i32, i32) {
    %c0_i32 = arith.constant 0 : i32
    %c0_i32_0 = arith.constant 0 : i32
    %c0_i32_1 = arith.constant 0 : i32
    return %c0_i32, %c0_i32_0 : i32, i32
  }
  func.func @transform_5(%arg0: i32) -> (i32, i32) {
    %c0_i32 = arith.constant 0 : i32
    %c0_i32_0 = arith.constant 0 : i32
    %c0_i32_1 = arith.constant 0 : i32
    return %c0_i32, %c0_i32_0 : i32, i32
  }
  func.func @transform_6(%arg0: i32) -> (i32, i32) {
    %c0_i32 = arith.constant 0 : i32
    %c0_i32_0 = arith.constant 0 : i32
    %c0_i32_1 = arith.constant 0 : i32
    return %c0_i32, %c0_i32_0 : i32, i32
  }
  func.func @transform_7(%arg0: i32) -> (i32, i32) {
    %c0_i32 = arith.constant 0 : i32
    %c0_i32_0 = arith.constant 0 : i32
    %c0_i32_1 = arith.constant 0 : i32
    return %c0_i32, %c0_i32_0 : i32, i32
  }
  func.func @transform_8(%arg0: i32) -> (i32, i32) {
    %c0_i32 = arith.constant 0 : i32
    %c0_i32_0 = arith.constant 0 : i32
    %c0_i32_1 = arith.constant 0 : i32
    return %c0_i32, %c0_i32_0 : i32, i32
  }
  func.func @transform_9(%arg0: i32) -> (i32, i32) {
    %c0_i32 = arith.constant 0 : i32
    %c0_i32_0 = arith.constant 0 : i32
    %c0_i32_1 = arith.constant 0 : i32
    return %c0_i32, %c0_i32_0 : i32, i32
  }
  func.func @transform_10(%arg0: i32) -> (i32, i32) {
    %c0_i32 = arith.constant 0 : i32
    %c0_i32_0 = arith.constant 0 : i32
    %c0_i32_1 = arith.constant 0 : i32
    return %c0_i32, %c0_i32_0 : i32, i32
  }
  func.func @transform_11(%arg0: i32) -> (i32, i32) {
    %c0_i32 = arith.constant 0 : i32
    %c0_i32_0 = arith.constant 0 : i32
    %c0_i32_1 = arith.constant 0 : i32
    return %c0_i32, %c0_i32_0 : i32, i32
  }
  func.func @transform_12(%arg0: i32) -> (i32, i32) {
    %c0_i32 = arith.constant 0 : i32
    %c0_i32_0 = arith.constant 0 : i32
    %c0_i32_1 = arith.constant 0 : i32
    return %c0_i32, %c0_i32_0 : i32, i32
  }
  func.func @transform_13(%arg0: i32) -> (i32, i32) {
    %c0_i32 = arith.constant 0 : i32
    %c0_i32_0 = arith.constant 0 : i32
    %c0_i32_1 = arith.constant 0 : i32
    return %c0_i32, %c0_i32_0 : i32, i32
  }
  func.func @transform_14(%arg0: i32) -> (i32, i32) {
    %c0_i32 = arith.constant 0 : i32
    %c0_i32_0 = arith.constant 0 : i32
    %c0_i32_1 = arith.constant 0 : i32
    return %c0_i32, %c0_i32_0 : i32, i32
  }
}

</mosaic_0001>

<llo_original>
// kernel: two_head_forward.1
$region0: #{two_head_forward.1}
  #allocation0 [shape = 'u32[]', space=smem, size = 0x4, offset = 0x4, fixed_abs, tag = 'smem constant byte address 0x4 - core index']
  #allocation1 [shape = 'u32[144,128]{1,0:T(1,128)}', space=vmem, size = 0x12000, scoped, tag = 'internal scratch']
  #allocation2 [shape = 'f32[2,32]{1,0:T(2,128)}', space=vmem, size = 0x400, scoped, tag = 'scratch operand']
  %s0 = inlined_call_operand.vmem [shape: f32[2,4,256], index: 0, kind: input, shape index: {}]
  %s1 = inlined_call_operand.vmem [shape: f32[32,4], index: 1, kind: input, shape index: {}]
  %s2 = inlined_call_operand.vmem [shape: f32[32,1], index: 2, kind: input, shape index: {}]
  %s3 = inlined_call_operand.vmem [shape: f32[32,256], index: 3, kind: input, shape index: {}]
  %s4 = inlined_call_operand.vmem [shape: f32[1,256], index: 4, kind: input, shape index: {}]
  %s5 = inlined_call_operand.vmem [shape: f32[1,128], index: 5, kind: input, shape index: {}]
  %s6 = inlined_call_operand.vmem [shape: f32[1,128], index: 6, kind: input, shape index: {}]
  %s7 = inlined_call_operand.vmem [shape: f32[128,128], index: 7, kind: input, shape index: {}]
  %s8 = inlined_call_operand.vmem [shape: f32[1,128], index: 8, kind: input, shape index: {}]
  %s9 = inlined_call_operand.vmem [shape: f32[1,128], index: 9, kind: input, shape index: {}]
  %s10 = inlined_call_operand.vmem [shape: f32[1,128], index: 10, kind: input, shape index: {}]
  %s11 = inlined_call_operand.vmem [shape: f32[128,128], index: 11, kind: input, shape index: {}]
  %s12 = inlined_call_operand.vmem [shape: f32[1,128], index: 12, kind: input, shape index: {}]
  %s13 = inlined_call_operand.hbm [shape: f32[2,128], index: 13, kind: output, shape index: {0}]
  %s14 = inlined_call_operand.hbm [shape: f32[2,128], index: 14, kind: output, shape index: {1}]
  %15 = xla_tuple %s13, %s14
  %s16 = sld [smem:[#allocation0]]
  $region74: #{two_head_forward.1} parent=0
    _
  %s18 = ssub.s32 1, %s16
  %s19 = scalar_select 0, %s18, %s16
  $region1: #{two_head_forward.1} parent=0
    #allocation3 [shape = 'u8[1024]{0}', space=vmem, size = 0x400, scoped, tag = 'output window, operand 0, single buffered']
    #allocation4 [shape = 's32[1]{0}', space=sflag, size = 0x4, scoped, tag = 'scoped memory for two_head_forward.1']
    #allocation5 [shape = 'u8[1024]{0}', space=vmem, size = 0x400, scoped, tag = 'output window, operand 1, single buffered']
    #allocation6 [shape = 's32[1]{0}', space=sflag, size = 0x4, scoped, tag = 'scoped memory for two_head_forward.1']
    %20 = vsyncpa [#allocation4], 0
    %21 = vsyncpa [#allocation6], 0
    // Predicated region
    $region2: #{two_head_forward.1} parent=1 // pred_check
      _
    $region3: #{two_head_forward.1} parent=1 // pred_check_branch
      %23 = sbr.rel (0) target = $region5
    $region4: #{two_head_forward.1} parent=1 // pred_region
      _
    $region5: #{two_head_forward.1} parent=1 // pred_fallthru
      _
    // Predicated region
    $region6: #{two_head_forward.1} parent=1 // pred_check
      _
    $region7: #{two_head_forward.1} parent=1 // pred_check_branch
      %25 = sbr.rel (0) target = $region9
    $region8: #{two_head_forward.1} parent=1 // pred_region
      _
    $region9: #{two_head_forward.1} parent=1 // pred_fallthru
      _
    // Predicated region
    $region10: #{two_head_forward.1} parent=1 // pred_check
      _
    $region11: #{two_head_forward.1} parent=1 // pred_check_branch
      %27 = sbr.rel (0) target = $region13
    $region12: #{two_head_forward.1} parent=1 // pred_region
      _
    $region13: #{two_head_forward.1} parent=1 // pred_fallthru
      _
    // Predicated region
    $region14: #{two_head_forward.1} parent=1 // pred_check
      _
    $region15: #{two_head_forward.1} parent=1 // pred_check_branch
      %29 = sbr.rel (0) target = $region17
    $region16: #{two_head_forward.1} parent=1 // pred_region
      _
    $region17: #{two_head_forward.1} parent=1 // pred_fallthru
      _
    // Predicated region
    $region18: #{two_head_forward.1} parent=1 // pred_check
      _
    $region19: #{two_head_forward.1} parent=1 // pred_check_branch
      %31 = sbr.rel (0) target = $region21
    $region20: #{two_head_forward.1} parent=1 // pred_region
      _
    $region21: #{two_head_forward.1} parent=1 // pred_fallthru
      _
    // Predicated region
    $region22: #{two_head_forward.1} parent=1 // pred_check
      _
    $region23: #{two_head_forward.1} parent=1 // pred_check_branch
      %33 = sbr.rel (0) target = $region25
    $region24: #{two_head_forward.1} parent=1 // pred_region
      _
    $region25: #{two_head_forward.1} parent=1 // pred_fallthru
      _
    // Predicated region
    $region26: #{two_head_forward.1} parent=1 // pred_check
      _
    $region27: #{two_head_forward.1} parent=1 // pred_check_branch
      %35 = sbr.rel (0) target = $region29
    $region28: #{two_head_forward.1} parent=1 // pred_region
      _
    $region29: #{two_head_forward.1} parent=1 // pred_fallthru
      _
    // Predicated region
    $region30: #{two_head_forward.1} parent=1 // pred_check
      _
    $region31: #{two_head_forward.1} parent=1 // pred_check_branch
      %37 = sbr.rel (0) target = $region33
    $region32: #{two_head_forward.1} parent=1 // pred_region
      _
    $region33: #{two_head_forward.1} parent=1 // pred_fallthru
      _
    // Predicated region
    $region34: #{two_head_forward.1} parent=1 // pred_check
      _
    $region35: #{two_head_forward.1} parent=1 // pred_check_branch
      %39 = sbr.rel (0) target = $region37
    $region36: #{two_head_forward.1} parent=1 // pred_region
      _
    $region37: #{two_head_forward.1} parent=1 // pred_fallthru
      _
    // Predicated region
    $region38: #{two_head_forward.1} parent=1 // pred_check
      _
    $region39: #{two_head_forward.1} parent=1 // pred_check_branch
      %41 = sbr.rel (0) target = $region41
    $region40: #{two_head_forward.1} parent=1 // pred_region
      _
    $region41: #{two_head_forward.1} parent=1 // pred_fallthru
      _
    // Predicated region
    $region42: #{two_head_forward.1} parent=1 // pred_check
      _
    $region43: #{two_head_forward.1} parent=1 // pred_check_branch
      %43 = sbr.rel (0) target = $region45
    $region44: #{two_head_forward.1} parent=1 // pred_region
      _
    $region45: #{two_head_forward.1} parent=1 // pred_fallthru
      _
    // Predicated region
    $region46: #{two_head_forward.1} parent=1 // pred_check
      _
    $region47: #{two_head_forward.1} parent=1 // pred_check_branch
      %45 = sbr.rel (0) target = $region49
    $region48: #{two_head_forward.1} parent=1 // pred_region
      _
    $region49: #{two_head_forward.1} parent=1 // pred_fallthru
      _
    // Predicated region
    $region50: #{two_head_forward.1} parent=1 // pred_check
      _
    $region51: #{two_head_forward.1} parent=1 // pred_check_branch
      %47 = sbr.rel (0) target = $region53
    $region52: #{two_head_forward.1} parent=1 // pred_region
      _
    $region53: #{two_head_forward.1} parent=1 // pred_fallthru
      _
    %v48 = vld [vmem:[%s0] sm:$0xff]
    %v49 = vld [vmem:[%s0 + $0x8] sm:$0xff]
    %v50 = vld [vmem:[%s1] sm:$0xff]
    %v51 = vld [vmem:[%s1 + $0x8] sm:$0xff]
    %v52 = vld [vmem:[%s1 + $0x10] sm:$0xff]
    %v53 = vld [vmem:[%s1 + $0x18] sm:$0xff]
    %v54 = vld [vmem:[%s2] sm:$0xff]
    %v55 = vld [vmem:[%s2 + $0x8] sm:$0xff]
    %v56 = vld [vmem:[%s2 + $0x10] sm:$0xff]
    %v57 = vld [vmem:[%s2 + $0x18] sm:$0xff]
    %59 = vset.pattern.permute.xlu0 0
    %60 = vperm.xlu0 %59, %v54
    %v61 = vpop.permute.xlu0 %60
    %64 = vset.pattern.permute.xlu0 0
    %65 = vperm.xlu0 %64, %v55
    %v66 = vpop.permute.xlu0 %65
    %69 = vset.pattern.permute.xlu0 0
    %70 = vperm.xlu0 %69, %v56
    %v71 = vpop.permute.xlu0 %70
    %74 = vset.pattern.permute.xlu0 0
    %75 = vperm.xlu0 %74, %v57
    %v76 = vpop.permute.xlu0 %75
    %v80 = vlaneseq
    %v81 = vshrl.u32 %v80, 7
    %v82 = vsub.s32 0, %v81
    %v83 = vrot.slane %v48, %v82
    %v84 = vlaneseq
    %v85 = vshrl.u32 %v84, 7
    %v86 = vsub.s32 4, %v85
    %v87 = vrot.slane %v48, %v86
    %v88 = vlaneseq
    %v89 = vshrl.u32 %v88, 7
    %v90 = vsub.s32 0, %v89
    %v91 = vrot.slane %v49, %v90
    %v92 = vlaneseq
    %v93 = vshrl.u32 %v92, 7
    %v94 = vsub.s32 4, %v93
    %v95 = vrot.slane %v49, %v94
    %v100 = vlaneseq
    %v101 = vshrl.u32 %v100, 7
    %v102 = vsub.s32 0, %v101
    %v103 = vrot.slane %v83, %v102
    %v104 = vlaneseq
    %v105 = vshrl.u32 %v104, 7
    %v106 = vsub.s32 0, %v105
    %v107 = vrot.slane %v87, %v106
    %v108 = vlaneseq
    %v109 = vshrl.u32 %v108, 7
    %v110 = vsub.s32 0, %v109
    %v111 = vrot.slane %v91, %v110
    %v112 = vlaneseq
    %v113 = vshrl.u32 %v112, 7
    %v114 = vsub.s32 0, %v113
    %v115 = vrot.slane %v95, %v114
    %117 = vset.pattern.permute.xlu0 0
    %118 = vperm.xlu0 %117, %v50
    %v119 = vpop.permute.xlu0 %118
    %122 = vset.pattern.permute.xlu0 0
    %123 = vperm.xlu0 %122, %v51
    %v124 = vpop.permute.xlu0 %123
    %127 = vset.pattern.permute.xlu0 0
    %128 = vperm.xlu0 %127, %v52
    %v129 = vpop.permute.xlu0 %128
    %132 = vset.pattern.permute.xlu0 0
    %133 = vperm.xlu0 %132, %v53
    %v134 = vpop.permute.xlu0 %133
    %v136 = vmul.f32 %v103, %v119
    %v137 = vmul.f32 %v107, %v119
    %v138 = vmul.f32 %v103, %v124
    %v139 = vmul.f32 %v107, %v124
    %v140 = vmul.f32 %v103, %v129
    %v141 = vmul.f32 %v107, %v129
    %v142 = vmul.f32 %v103, %v134
    %v143 = vmul.f32 %v107, %v134
    %v144 = vmul.f32 %v111, %v119
    %v145 = vmul.f32 %v115, %v119
    %v146 = vmul.f32 %v111, %v124
    %v147 = vmul.f32 %v115, %v124
    %v148 = vmul.f32 %v111, %v129
    %v149 = vmul.f32 %v115, %v129
    %v150 = vmul.f32 %v111, %v134
    %v151 = vmul.f32 %v115, %v134
    %v152 = vadd.f32 %v61, %v136
    %v153 = vadd.f32 %v61, %v137
    %v154 = vadd.f32 %v66, %v138
    %v155 = vadd.f32 %v66, %v139
    %v156 = vadd.f32 %v71, %v140
    %v157 = vadd.f32 %v71, %v141
    %v158 = vadd.f32 %v76, %v142
    %v159 = vadd.f32 %v76, %v143
    %v160 = vadd.f32 %v61, %v144
    %v161 = vadd.f32 %v61, %v145
    %v162 = vadd.f32 %v66, %v146
    %v163 = vadd.f32 %v66, %v147
    %v164 = vadd.f32 %v71, %v148
    %v165 = vadd.f32 %v71, %v149
    %v166 = vadd.f32 %v76, %v150
    %v167 = vadd.f32 %v76, %v151
    %v168 = vlaneseq
    %v169 = vshrl.u32 %v168, 7
    %v170 = vsub.s32 1, %v169
    %v171 = vrot.slane %v48, %v170
    %v172 = vlaneseq
    %v173 = vshrl.u32 %v172, 7
    %v174 = vsub.s32 5, %v173
    %v175 = vrot.slane %v48, %v174
    %v176 = vlaneseq
    %v177 = vshrl.u32 %v176, 7
    %v178 = vsub.s32 1, %v177
    %v179 = vrot.slane %v49, %v178
    %v180 = vlaneseq
    %v181 = vshrl.u32 %v180, 7
    %v182 = vsub.s32 5, %v181
    %v183 = vrot.slane %v49, %v182
    %v188 = vlaneseq
    %v189 = vshrl.u32 %v188, 7
    %v190 = vsub.s32 1, %v189
    %v191 = vrot.slane %v171, %v190
    %v192 = vlaneseq
    %v193 = vshrl.u32 %v192, 7
    %v194 = vsub.s32 1, %v193
    %v195 = vrot.slane %v175, %v194
    %v196 = vlaneseq
    %v197 = vshrl.u32 %v196, 7
    %v198 = vsub.s32 1, %v197
    %v199 = vrot.slane %v179, %v198
    %v200 = vlaneseq
    %v201 = vshrl.u32 %v200, 7
    %v202 = vsub.s32 1, %v201
    %v203 = vrot.slane %v183, %v202
    %204 = vset.pattern.permute.xlu0 1
    %205 = vperm.xlu0 %204, %v50
    %v206 = vpop.permute.xlu0 %205
    %208 = vset.pattern.permute.xlu0 1
    %209 = vperm.xlu0 %208, %v51
    %v210 = vpop.permute.xlu0 %209
    %212 = vset.pattern.permute.xlu0 1
    %213 = vperm.xlu0 %212, %v52
    %v214 = vpop.permute.xlu0 %213
    %216 = vset.pattern.permute.xlu0 1
    %217 = vperm.xlu0 %216, %v53
    %v218 = vpop.permute.xlu0 %217
    %v220 = vmul.f32 %v191, %v206
    %v221 = vmul.f32 %v195, %v206
    %v222 = vmul.f32 %v191, %v210
    %v223 = vmul.f32 %v195, %v210
    %v224 = vmul.f32 %v191, %v214
    %v225 = vmul.f32 %v195, %v214
    %v226 = vmul.f32 %v191, %v218
    %v227 = vmul.f32 %v195, %v218
    %v228 = vmul.f32 %v199, %v206
    %v229 = vmul.f32 %v203, %v206
    %v230 = vmul.f32 %v199, %v210
    %v231 = vmul.f32 %v203, %v210
    %v232 = vmul.f32 %v199, %v214
    %v233 = vmul.f32 %v203, %v214
    %v234 = vmul.f32 %v199, %v218
    %v235 = vmul.f32 %v203, %v218
    %v236 = vadd.f32 %v152, %v220
    %v237 = vadd.f32 %v153, %v221
    %v238 = vadd.f32 %v154, %v222
    %v239 = vadd.f32 %v155, %v223
    %v240 = vadd.f32 %v156, %v224
    %v241 = vadd.f32 %v157, %v225
    %v242 = vadd.f32 %v158, %v226
    %v243 = vadd.f32 %v159, %v227
    %v244 = vadd.f32 %v160, %v228
    %v245 = vadd.f32 %v161, %v229
    %v246 = vadd.f32 %v162, %v230
    %v247 = vadd.f32 %v163, %v231
    %v248 = vadd.f32 %v164, %v232
    %v249 = vadd.f32 %v165, %v233
    %v250 = vadd.f32 %v166, %v234
    %v251 = vadd.f32 %v167, %v235
    %v252 = vlaneseq
    %v253 = vshrl.u32 %v252, 7
    %v254 = vsub.s32 2, %v253
    %v255 = vrot.slane %v48, %v254
    %v256 = vlaneseq
    %v257 = vshrl.u32 %v256, 7
    %v258 = vsub.s32 6, %v257
    %v259 = vrot.slane %v48, %v258
    %v260 = vlaneseq
    %v261 = vshrl.u32 %v260, 7
    %v262 = vsub.s32 2, %v261
    %v263 = vrot.slane %v49, %v262
    %v264 = vlaneseq
    %v265 = vshrl.u32 %v264, 7
    %v266 = vsub.s32 6, %v265
    %v267 = vrot.slane %v49, %v266
    %v272 = vlaneseq
    %v273 = vshrl.u32 %v272, 7
    %v274 = vsub.s32 2, %v273
    %v275 = vrot.slane %v255, %v274
    %v276 = vlaneseq
    %v277 = vshrl.u32 %v276, 7
    %v278 = vsub.s32 2, %v277
    %v279 = vrot.slane %v259, %v278
    %v280 = vlaneseq
    %v281 = vshrl.u32 %v280, 7
    %v282 = vsub.s32 2, %v281
    %v283 = vrot.slane %v263, %v282
    %v284 = vlaneseq
    %v285 = vshrl.u32 %v284, 7
    %v286 = vsub.s32 2, %v285
    %v287 = vrot.slane %v267, %v286
    %288 = vset.pattern.permute.xlu0 2
    %289 = vperm.xlu0 %288, %v50
    %v290 = vpop.permute.xlu0 %289
    %292 = vset.pattern.permute.xlu0 2
    %293 = vperm.xlu0 %292, %v51
    %v294 = vpop.permute.xlu0 %293
    %296 = vset.pattern.permute.xlu0 2
    %297 = vperm.xlu0 %296, %v52
    %v298 = vpop.permute.xlu0 %297
    %300 = vset.pattern.permute.xlu0 2
    %301 = vperm.xlu0 %300, %v53
    %v302 = vpop.permute.xlu0 %301
    %v304 = vmul.f32 %v275, %v290
    %v305 = vmul.f32 %v279, %v290
    %v306 = vmul.f32 %v275, %v294
    %v307 = vmul.f32 %v279, %v294
    %v308 = vmul.f32 %v275, %v298
    %v309 = vmul.f32 %v279, %v298
    %v310 = vmul.f32 %v275, %v302
    %v311 = vmul.f32 %v279, %v302
    %v312 = vmul.f32 %v283, %v290
    %v313 = vmul.f32 %v287, %v290
    %v314 = vmul.f32 %v283, %v294
    %v315 = vmul.f32 %v287, %v294
    %v316 = vmul.f32 %v283, %v298
    %v317 = vmul.f32 %v287, %v298
    %v318 = vmul.f32 %v283, %v302
    %v319 = vmul.f32 %v287, %v302
    %v320 = vadd.f32 %v236, %v304
    %v321 = vadd.f32 %v237, %v305
    %v322 = vadd.f32 %v238, %v306
    %v323 = vadd.f32 %v239, %v307
    %v324 = vadd.f32 %v240, %v308
    %v325 = vadd.f32 %v241, %v309
    %v326 = vadd.f32 %v242, %v310
    %v327 = vadd.f32 %v243, %v311
    %v328 = vadd.f32 %v244, %v312
    %v329 = vadd.f32 %v245, %v313
    %v330 = vadd.f32 %v246, %v314
    %v331 = vadd.f32 %v247, %v315
    %v332 = vadd.f32 %v248, %v316
    %v333 = vadd.f32 %v249, %v317
    %v334 = vadd.f32 %v250, %v318
    %v335 = vadd.f32 %v251, %v319
    %v336 = vlaneseq
    %v337 = vshrl.u32 %v336, 7
    %v338 = vsub.s32 3, %v337
    %v339 = vrot.slane %v48, %v338
    %v340 = vlaneseq
    %v341 = vshrl.u32 %v340, 7
    %v342 = vsub.s32 7, %v341
    %v343 = vrot.slane %v48, %v342
    %v344 = vlaneseq
    %v345 = vshrl.u32 %v344, 7
    %v346 = vsub.s32 3, %v345
    %v347 = vrot.slane %v49, %v346
    %v348 = vlaneseq
    %v349 = vshrl.u32 %v348, 7
    %v350 = vsub.s32 7, %v349
    %v351 = vrot.slane %v49, %v350
    %v356 = vlaneseq
    %v357 = vshrl.u32 %v356, 7
    %v358 = vsub.s32 3, %v357
    %v359 = vrot.slane %v339, %v358
    %v360 = vlaneseq
    %v361 = vshrl.u32 %v360, 7
    %v362 = vsub.s32 3, %v361
    %v363 = vrot.slane %v343, %v362
    %v364 = vlaneseq
    %v365 = vshrl.u32 %v364, 7
    %v366 = vsub.s32 3, %v365
    %v367 = vrot.slane %v347, %v366
    %v368 = vlaneseq
    %v369 = vshrl.u32 %v368, 7
    %v370 = vsub.s32 3, %v369
    %v371 = vrot.slane %v351, %v370
    %372 = vset.pattern.permute.xlu0 3
    %373 = vperm.xlu0 %372, %v50
    %v374 = vpop.permute.xlu0 %373
    %376 = vset.pattern.permute.xlu0 3
    %377 = vperm.xlu0 %376, %v51
    %v378 = vpop.permute.xlu0 %377
    %380 = vset.pattern.permute.xlu0 3
    %381 = vperm.xlu0 %380, %v52
    %v382 = vpop.permute.xlu0 %381
    %384 = vset.pattern.permute.xlu0 3
    %385 = vperm.xlu0 %384, %v53
    %v386 = vpop.permute.xlu0 %385
    %v388 = vmul.f32 %v359, %v374
    %v389 = vmul.f32 %v363, %v374
    %v390 = vmul.f32 %v359, %v378
    %v391 = vmul.f32 %v363, %v378
    %v392 = vmul.f32 %v359, %v382
    %v393 = vmul.f32 %v363, %v382
    %v394 = vmul.f32 %v359, %v386
    %v395 = vmul.f32 %v363, %v386
    %v396 = vmul.f32 %v367, %v374
    %v397 = vmul.f32 %v371, %v374
    %v398 = vmul.f32 %v367, %v378
    %v399 = vmul.f32 %v371, %v378
    %v400 = vmul.f32 %v367, %v382
    %v401 = vmul.f32 %v371, %v382
    %v402 = vmul.f32 %v367, %v386
    %v403 = vmul.f32 %v371, %v386
    %v404 = vadd.f32 %v320, %v388
    %v405 = vadd.f32 %v321, %v389
    %v406 = vadd.f32 %v322, %v390
    %v407 = vadd.f32 %v323, %v391
    %v408 = vadd.f32 %v324, %v392
    %v409 = vadd.f32 %v325, %v393
    %v410 = vadd.f32 %v326, %v394
    %v411 = vadd.f32 %v327, %v395
    %v412 = vadd.f32 %v328, %v396
    %v413 = vadd.f32 %v329, %v397
    %v414 = vadd.f32 %v330, %v398
    %v415 = vadd.f32 %v331, %v399
    %v416 = vadd.f32 %v332, %v400
    %v417 = vadd.f32 %v333, %v401
    %v418 = vadd.f32 %v334, %v402
    %v419 = vadd.f32 %v335, %v403
    %v420 = vmax.f32 %v404, 0.0
    %v421 = vmax.f32 %v405, 0.0
    %v422 = vmax.f32 %v406, 0.0
    %v423 = vmax.f32 %v407, 0.0
    %v424 = vmax.f32 %v408, 0.0
    %v425 = vmax.f32 %v409, 0.0
    %v426 = vmax.f32 %v410, 0.0
    %v427 = vmax.f32 %v411, 0.0
    %v428 = vmax.f32 %v412, 0.0
    %v429 = vmax.f32 %v413, 0.0
    %v430 = vmax.f32 %v414, 0.0
    %v431 = vmax.f32 %v415, 0.0
    %v432 = vmax.f32 %v416, 0.0
    %v433 = vmax.f32 %v417, 0.0
    %v434 = vmax.f32 %v418, 0.0
    %v435 = vmax.f32 %v419, 0.0
    %v436 = vadd.f32 %v420, %v421
    %437 = vadd.xlane.f32.xlu0 %v436
    %v438 = vpop.xlane.xlu0 %437
    %v439 = vadd.f32 %v422, %v423
    %440 = vadd.xlane.f32.xlu0 %v439
    %v441 = vpop.xlane.xlu0 %440
    %v442 = vadd.f32 %v424, %v425
    %443 = vadd.xlane.f32.xlu0 %v442
    %v444 = vpop.xlane.xlu0 %443
    %v445 = vadd.f32 %v426, %v427
    %446 = vadd.xlane.f32.xlu0 %v445
    %v447 = vpop.xlane.xlu0 %446
    %v448 = vadd.f32 %v428, %v429
    %449 = vadd.xlane.f32.xlu0 %v448
    %v450 = vpop.xlane.xlu0 %449
    %v451 = vadd.f32 %v430, %v431
    %452 = vadd.xlane.f32.xlu0 %v451
    %v453 = vpop.xlane.xlu0 %452
    %v454 = vadd.f32 %v432, %v433
    %455 = vadd.xlane.f32.xlu0 %v454
    %v456 = vpop.xlane.xlu0 %455
    %v457 = vadd.f32 %v434, %v435
    %458 = vadd.xlane.f32.xlu0 %v457
    %v459 = vpop.xlane.xlu0 %458
    %v460 = vrcp.pop 256.0
    %v461 = vmul.f32 %v438, %v460
    %v462 = vmul.f32 %v441, %v460
    %v463 = vmul.f32 %v444, %v460
    %v464 = vmul.f32 %v447, %v460
    %v465 = vmul.f32 %v450, %v460
    %v466 = vmul.f32 %v453, %v460
    %v467 = vmul.f32 %v456, %v460
    %v468 = vmul.f32 %v459, %v460
    %v477 = vlaneseq
    %v478 = vand.u32 %v477, 127
    %v479 = vlaneseq
    %v480 = vshrl.u32 %v479, 7
    %v481 = vsub.s32 %v478, %v480
    %v482 = vrot.slane %v461, %v481
    %v483 = vadd.s32 %v478, 4294967288
    %v484 = vlaneseq
    %v485 = vshrl.u32 %v484, 7
    %v486 = vsub.s32 %v483, %v485
    %v487 = vrot.slane %v462, %v486
    %vm488 = vcmask 130112
    %v489 = vsel %vm488, %v487, %v482
    %v490 = vadd.s32 %v478, 4294967280
    %v491 = vlaneseq
    %v492 = vshrl.u32 %v491, 7
    %v493 = vsub.s32 %v490, %v492
    %v494 = vrot.slane %v463, %v493
    %vm495 = vcmask 195712
    %v496 = vsel %vm495, %v494, %v489
    %v497 = vadd.s32 %v478, 4294967272
    %v498 = vlaneseq
    %v499 = vshrl.u32 %v498, 7
    %v500 = vsub.s32 %v497, %v499
    %v501 = vrot.slane %v464, %v500
    %vm502 = vcmask 261312
    %v503 = vsel %vm502, %v501, %v496
    %v504 = vlaneseq
    %v505 = vshrl.u32 %v504, 7
    %v506 = vsub.s32 %v478, %v505
    %v507 = vrot.slane %v465, %v506
    %v508 = vlaneseq
    %v509 = vshrl.u32 %v508, 7
    %v510 = vsub.s32 %v483, %v509
    %v511 = vrot.slane %v466, %v510
    %v512 = vsel %vm488, %v511, %v507
    %v513 = vlaneseq
    %v514 = vshrl.u32 %v513, 7
    %v515 = vsub.s32 %v490, %v514
    %v516 = vrot.slane %v467, %v515
    %v517 = vsel %vm495, %v516, %v512
    %v518 = vlaneseq
    %v519 = vshrl.u32 %v518, 7
    %v520 = vsub.s32 %v497, %v519
    %v521 = vrot.slane %v468, %v520
    %v522 = vsel %vm502, %v521, %v517
    %vm523 = vcmask 1041409
    %v524 = vsel %vm523, %v522, %v503
    %vm526 = vcmask 254976
    %527 = vst.msk [vmem:[#allocation2] sm:$0x3] %vm526, %v524
    %p528 = scmp.eq.s32.totalorder 0, 0
    // Predicated region
    $region54: #{two_head_forward.1} parent=1 // pred_check
      %p529 = pneg %p528
    $region55: #{two_head_forward.1} parent=1 // pred_check_branch
      %531 = sbr.rel (%p529) target = $region57
    $region56: #{two_head_forward.1} parent=1 // pred_region
      %v532 = vld [vmem:[#allocation2] sm:$0x3]
      %v533 = vld [vmem:[%s3] sm:$0xff]
      %v534 = vld [vmem:[%s3 + $0x8] sm:$0xff]
      %v535 = vld [vmem:[%s3 + $0x10] sm:$0xff]
      %v536 = vld [vmem:[%s3 + $0x18] sm:$0xff]
      %v537 = vld [vmem:[%s3 + $0x20] sm:$0xff]
      %v538 = vld [vmem:[%s3 + $0x28] sm:$0xff]
      %v539 = vld [vmem:[%s3 + $0x30] sm:$0xff]
      %v540 = vld [vmem:[%s3 + $0x38] sm:$0xff]
      %v541 = vld [vmem:[%s4] sm:$0x3]
      %v543 = vlaneseq
      %v544 = vshrl.u32 %v543, 7
      %v545 = vsub.s32 0, %v544
      %v546 = vrot.slane %v541, %v545
      %v547 = vlaneseq
      %v548 = vshrl.u32 %v547, 7
      %v549 = vsub.s32 1, %v548
      %v550 = vrot.slane %v541, %v549
      %vm553 = vcmask 261120
      %v555 = vsel %vm553, %v532, 0
      %557 = vmatprep.subr.mxu0 %v534
      %558 = vmatpush1.msra.mxu0 %v533
      %559 = vmatprep.subr.mxu0 %v536
      %560 = vmatpush1.msra.mxu0 %v535
      %561 = vmatprep.subr.mxu0 %v538
      %562 = vmatpush1.msra.mxu0 %v537
      %563 = vmatprep.subr.mxu0 %v540
      %564 = vmatpush1.msra.mxu0 %v539
      %565 = vmatprep.subr.mxu0 0.0
      %566 = vmatpush1.msra.mxu0 0.0
      %567 = vmatprep.subr.mxu0 0.0
      %568 = vmatpush1.msra.mxu0 0.0
      %569 = vmatprep.subr.mxu0 0.0
      %570 = vmatpush1.msra.mxu0 0.0
      %571 = vmatprep.subr.mxu0 0.0
      %572 = vmatpush1.msra.mxu0 0.0
      %573 = vmatprep.subr.mxu0 0.0
      %574 = vmatpush1.msra.mxu0 0.0
      %575 = vmatprep.subr.mxu0 0.0
      %576 = vmatpush1.msra.mxu0 0.0
      %577 = vmatprep.subr.mxu0 0.0
      %578 = vmatpush1.msra.mxu0 0.0
      %579 = vmatprep.subr.mxu0 0.0
      %580 = vmatpush1.msra.mxu0 0.0
      %581 = vmatprep.subr.mxu0 0.0
      %582 = vmatpush1.msra.mxu0 0.0
      %583 = vmatprep.subr.mxu0 0.0
      %584 = vmatpush1.msra.mxu0 0.0
      %585 = vmatprep.subr.mxu0 0.0
      %586 = vmatpush1.msra.mxu0 0.0
      %587 = vmatprep.subr.mxu0 0.0
      %588 = vmatpush1.msra.mxu0 0.0
      %589 = vmatprep.subr.mxu0 0.0
      %590 = vmatpush1.msra.mxu0 0.0
      %591 = vmatprep.subr.mxu0 0.0
      %592 = vmatpush1.msra.mxu0 0.0
      %593 = vmatprep.subr.mxu0 0.0
      %594 = vmatpush1.msra.mxu0 0.0
      %595 = vmatprep.subr.mxu0 0.0
      %596 = vmatpush1.msra.mxu0 0.0
      %597 = vmatprep.subr.mxu0 0.0
      %598 = vmatpush1.msra.mxu0 0.0
      %599 = vmatprep.subr.mxu0 0.0
      %600 = vmatpush1.msra.mxu0 0.0
      %601 = vmatprep.subr.mxu0 0.0
      %602 = vmatpush1.msra.mxu0 0.0
      %603 = vmatprep.subr.mxu0 0.0
      %604 = vmatpush1.msra.mxu0 0.0
      %605 = vmatprep.subr.mxu0 0.0
      %606 = vmatpush1.msra.mxu0 0.0
      %607 = vmatprep.subr.mxu0 0.0
      %608 = vmatpush1.msra.mxu0 0.0
      %609 = vmatprep.subr.mxu0 0.0
      %610 = vmatpush1.msra.mxu0 0.0
      %611 = vmatprep.subr.mxu0 0.0
      %612 = vmatpush1.msra.mxu0 0.0
      %613 = vmatprep.subr.mxu0 0.0
      %614 = vmatpush1.msra.mxu0 0.0
      %615 = vmatprep.subr.mxu0 0.0
      %616 = vmatpush1.msra.mxu0 0.0
      %617 = vmatprep.subr.mxu0 0.0
      %618 = vmatpush1.msra.mxu0 0.0
      %619 = vmatprep.subr.mxu0 0.0
      %620 = vmatpush1.msra.mxu0 0.0
      %621 = vmatprep.mubr.f32.mxu0 0.0
      %622 = vmatmul.mubr.f32.gmra.mrb[0].mxu0 %v555
      %v623 = vpop.f32.mrb[0].mxu0
      %v624 = vadd.f32 %v546, %v623
      %v625 = vpop.f32.mrb[0].mxu0
      %v626 = vadd.f32 %v550, %v625
      %627 = vdwg.mxu0
      %628 = vst [vmem:[#allocation3] sm:$0x3] %v624
      %v629 = vld [vmem:[%s5] sm:$0x1]
      %v630 = vld [vmem:[%s6] sm:$0x1]
      %vm631 = vcmask 1041408
      %v632 = vsel %vm631, %v626, 0.0
      %v633 = vrot.slane %v632, 4
      %v634 = vadd.f32 %v632, %v633
      %v635 = vrot.slane %v634, 2
      %v636 = vadd.f32 %v634, %v635
      %v637 = vrot.slane %v636, 1
      %v638 = vadd.f32 %v636, %v637
      %v639 = vrcp.pop 2.0
      %v640 = vmul.f32 %v638, %v639
      %v641 = vsub.f32 %v626, %v640
      %v642 = vmul.f32 %v641, %v641
      %v643 = vsel %vm631, %v642, 0.0
      %v644 = vrot.slane %v643, 4
      %v645 = vadd.f32 %v643, %v644
      %v646 = vrot.slane %v645, 2
      %v647 = vadd.f32 %v645, %v646
      %v648 = vrot.slane %v647, 1
      %v649 = vadd.f32 %v647, %v648
      %v650 = vmul.f32 %v649, %v639
      %v651 = vadd.f32 %v650, 1e-05
      %v652 = vrsqrt.pop %v651
      %v653 = vmul.f32 %v641, %v652
      %v655 = vlaneseq
      %v656 = vshrl.u32 %v655, 7
      %v657 = vsub.s32 0, %v656
      %v658 = vrot.slane %v629, %v657
      %v660 = vmul.f32 %v653, %v658
      %v662 = vlaneseq
      %v663 = vshrl.u32 %v662, 7
      %v664 = vsub.s32 0, %v663
      %v665 = vrot.slane %v630, %v664
      %v667 = vadd.f32 %v660, %v665
      %vm668 = vcmp.gt.f32.partialorder %v667, 0.0
      %v669 = vmul.f32 %v667, 0.1
      %v670 = vsel %vm668, %v667, %v669
      %v671 = vld [vmem:[%s7] sm:$0xff]
      %v672 = vld [vmem:[%s7 + $0x8] sm:$0xff]
      %v673 = vld [vmem:[%s7 + $0x10] sm:$0xff]
      %v674 = vld [vmem:[%s7 + $0x18] sm:$0xff]
      %v675 = vld [vmem:[%s7 + $0x20] sm:$0xff]
      %v676 = vld [vmem:[%s7 + $0x28] sm:$0xff]
      %v677 = vld [vmem:[%s7 + $0x30] sm:$0xff]
      %v678 = vld [vmem:[%s7 + $0x38] sm:$0xff]
      %v679 = vld [vmem:[%s7 + $0x40] sm:$0xff]
      %v680 = vld [vmem:[%s7 + $0x48] sm:$0xff]
      %v681 = vld [vmem:[%s7 + $0x50] sm:$0xff]
      %v682 = vld [vmem:[%s7 + $0x58] sm:$0xff]
      %v683 = vld [vmem:[%s7 + $0x60] sm:$0xff]
      %v684 = vld [vmem:[%s7 + $0x68] sm:$0xff]
      %v685 = vld [vmem:[%s7 + $0x70] sm:$0xff]
      %v686 = vld [vmem:[%s7 + $0x78] sm:$0xff]
      %v687 = vld [vmem:[%s8] sm:$0x1]
      %v689 = vlaneseq
      %v690 = vshrl.u32 %v689, 7
      %v691 = vsub.s32 0, %v690
      %v692 = vrot.slane %v687, %v691
      %694 = vmatprep.subr.mxu0 0.0
      %695 = vmatpush1.msra.mxu0 %v671
      %696 = vmatprep.subr.mxu0 0.0
      %697 = vmatpush1.msra.mxu0 %v672
      %698 = vmatprep.subr.mxu0 0.0
      %699 = vmatpush1.msra.mxu0 %v673
      %700 = vmatprep.subr.mxu0 0.0
      %701 = vmatpush1.msra.mxu0 %v674
      %702 = vmatprep.subr.mxu0 0.0
      %703 = vmatpush1.msra.mxu0 %v675
      %704 = vmatprep.subr.mxu0 0.0
      %705 = vmatpush1.msra.mxu0 %v676
      %706 = vmatprep.subr.mxu0 0.0
      %707 = vmatpush1.msra.mxu0 %v677
      %708 = vmatprep.subr.mxu0 0.0
      %709 = vmatpush1.msra.mxu0 %v678
      %710 = vmatprep.subr.mxu0 0.0
      %711 = vmatpush1.msra.mxu0 %v679
      %712 = vmatprep.subr.mxu0 0.0
      %713 = vmatpush1.msra.mxu0 %v680
      %714 = vmatprep.subr.mxu0 0.0
      %715 = vmatpush1.msra.mxu0 %v681
      %716 = vmatprep.subr.mxu0 0.0
      %717 = vmatpush1.msra.mxu0 %v682
      %718 = vmatprep.subr.mxu0 0.0
      %719 = vmatpush1.msra.mxu0 %v683
      %720 = vmatprep.subr.mxu0 0.0
      %721 = vmatpush1.msra.mxu0 %v684
      %722 = vmatprep.subr.mxu0 0.0
      %723 = vmatpush1.msra.mxu0 %v685
      %724 = vmatprep.subr.mxu0 0.0
      %725 = vmatpush1.msra.mxu0 %v686
      %726 = vmatprep.subr.mxu0 0.0
      %727 = vmatpush1.msra.mxu0 0.0
      %728 = vmatprep.subr.mxu0 0.0
      %729 = vmatpush1.msra.mxu0 0.0
      %730 = vmatprep.subr.mxu0 0.0
      %731 = vmatpush1.msra.mxu0 0.0
      %732 = vmatprep.subr.mxu0 0.0
      %733 = vmatpush1.msra.mxu0 0.0
      %734 = vmatprep.subr.mxu0 0.0
      %735 = vmatpush1.msra.mxu0 0.0
      %736 = vmatprep.subr.mxu0 0.0
      %737 = vmatpush1.msra.mxu0 0.0
      %738 = vmatprep.subr.mxu0 0.0
      %739 = vmatpush1.msra.mxu0 0.0
      %740 = vmatprep.subr.mxu0 0.0
      %741 = vmatpush1.msra.mxu0 0.0
      %742 = vmatprep.subr.mxu0 0.0
      %743 = vmatpush1.msra.mxu0 0.0
      %744 = vmatprep.subr.mxu0 0.0
      %745 = vmatpush1.msra.mxu0 0.0
      %746 = vmatprep.subr.mxu0 0.0
      %747 = vmatpush1.msra.mxu0 0.0
      %748 = vmatprep.subr.mxu0 0.0
      %749 = vmatpush1.msra.mxu0 0.0
      %750 = vmatprep.subr.mxu0 0.0
      %751 = vmatpush1.msra.mxu0 0.0
      %752 = vmatprep.subr.mxu0 0.0
      %753 = vmatpush1.msra.mxu0 0.0
      %754 = vmatprep.subr.mxu0 0.0
      %755 = vmatpush1.msra.mxu0 0.0
      %756 = vmatprep.subr.mxu0 0.0
      %757 = vmatpush1.msra.mxu0 0.0
      %758 = vmatprep.mubr.f32.mxu0 0.0
      %759 = vmatmul.mubr.f32.gmra.mrb[0].mxu0 %v670
      %v760 = vpop.f32.mrb[0].mxu0
      %v761 = vadd.f32 %v692, %v760
      %v762 = vpop.f32.mrb[0].mxu0
      %763 = vdwg.mxu0
      %v764 = vld [vmem:[%s9] sm:$0x1]
      %v765 = vld [vmem:[%s10] sm:$0x1]
      %v766 = vsel %vm631, %v761, 0.0
      %v767 = vrot.slane %v766, 4
      %v768 = vadd.f32 %v766, %v767
      %v769 = vrot.slane %v768, 2
      %v770 = vadd.f32 %v768, %v769
      %v771 = vrot.slane %v770, 1
      %v772 = vadd.f32 %v770, %v771
      %v773 = vmul.f32 %v772, %v639
      %v774 = vsub.f32 %v761, %v773
      %v775 = vmul.f32 %v774, %v774
      %v776 = vsel %vm631, %v775, 0.0
      %v777 = vrot.slane %v776, 4
      %v778 = vadd.f32 %v776, %v777
      %v779 = vrot.slane %v778, 2
      %v780 = vadd.f32 %v778, %v779
      %v781 = vrot.slane %v780, 1
      %v782 = vadd.f32 %v780, %v781
      %v783 = vmul.f32 %v782, %v639
      %v784 = vadd.f32 %v783, 1e-05
      %v785 = vrsqrt.pop %v784
      %v786 = vmul.f32 %v774, %v785
      %v788 = vlaneseq
      %v789 = vshrl.u32 %v788, 7
      %v790 = vsub.s32 0, %v789
      %v791 = vrot.slane %v764, %v790
      %v793 = vmul.f32 %v786, %v791
      %v795 = vlaneseq
      %v796 = vshrl.u32 %v795, 7
      %v797 = vsub.s32 0, %v796
      %v798 = vrot.slane %v765, %v797
      %v800 = vadd.f32 %v793, %v798
      %vm801 = vcmp.gt.f32.partialorder %v800, 0.0
      %v802 = vmul.f32 %v800, 0.1
      %v803 = vsel %vm801, %v800, %v802
      %v804 = vld [vmem:[%s11] sm:$0xff]
      %v805 = vld [vmem:[%s11 + $0x8] sm:$0xff]
      %v806 = vld [vmem:[%s11 + $0x10] sm:$0xff]
      %v807 = vld [vmem:[%s11 + $0x18] sm:$0xff]
      %v808 = vld [vmem:[%s11 + $0x20] sm:$0xff]
      %v809 = vld [vmem:[%s11 + $0x28] sm:$0xff]
      %v810 = vld [vmem:[%s11 + $0x30] sm:$0xff]
      %v811 = vld [vmem:[%s11 + $0x38] sm:$0xff]
      %v812 = vld [vmem:[%s11 + $0x40] sm:$0xff]
      %v813 = vld [vmem:[%s11 + $0x48] sm:$0xff]
      %v814 = vld [vmem:[%s11 + $0x50] sm:$0xff]
      %v815 = vld [vmem:[%s11 + $0x58] sm:$0xff]
      %v816 = vld [vmem:[%s11 + $0x60] sm:$0xff]
      %v817 = vld [vmem:[%s11 + $0x68] sm:$0xff]
      %v818 = vld [vmem:[%s11 + $0x70] sm:$0xff]
      %v819 = vld [vmem:[%s11 + $0x78] sm:$0xff]
      %v820 = vld [vmem:[%s12] sm:$0x1]
      %v822 = vlaneseq
      %v823 = vshrl.u32 %v822, 7
      %v824 = vsub.s32 0, %v823
      %v825 = vrot.slane %v820, %v824
      %827 = vmatprep.subr.mxu0 0.0
      %828 = vmatpush1.msra.mxu0 %v804
      %829 = vmatprep.subr.mxu0 0.0
      %830 = vmatpush1.msra.mxu0 %v805
      %831 = vmatprep.subr.mxu0 0.0
      %832 = vmatpush1.msra.mxu0 %v806
      %833 = vmatprep.subr.mxu0 0.0
      %834 = vmatpush1.msra.mxu0 %v807
      %835 = vmatprep.subr.mxu0 0.0
      %836 = vmatpush1.msra.mxu0 %v808
      %837 = vmatprep.subr.mxu0 0.0
      %838 = vmatpush1.msra.mxu0 %v809
      %839 = vmatprep.subr.mxu0 0.0
      %840 = vmatpush1.msra.mxu0 %v810
      %841 = vmatprep.subr.mxu0 0.0
      %842 = vmatpush1.msra.mxu0 %v811
      %843 = vmatprep.subr.mxu0 0.0
      %844 = vmatpush1.msra.mxu0 %v812
      %845 = vmatprep.subr.mxu0 0.0
      %846 = vmatpush1.msra.mxu0 %v813
      %847 = vmatprep.subr.mxu0 0.0
      %848 = vmatpush1.msra.mxu0 %v814
      %849 = vmatprep.subr.mxu0 0.0
      %850 = vmatpush1.msra.mxu0 %v815
      %851 = vmatprep.subr.mxu0 0.0
      %852 = vmatpush1.msra.mxu0 %v816
      %853 = vmatprep.subr.mxu0 0.0
      %854 = vmatpush1.msra.mxu0 %v817
      %855 = vmatprep.subr.mxu0 0.0
      %856 = vmatpush1.msra.mxu0 %v818
      %857 = vmatprep.subr.mxu0 0.0
      %858 = vmatpush1.msra.mxu0 %v819
      %859 = vmatprep.subr.mxu0 0.0
      %860 = vmatpush1.msra.mxu0 0.0
      %861 = vmatprep.subr.mxu0 0.0
      %862 = vmatpush1.msra.mxu0 0.0
      %863 = vmatprep.subr.mxu0 0.0
      %864 = vmatpush1.msra.mxu0 0.0
      %865 = vmatprep.subr.mxu0 0.0
      %866 = vmatpush1.msra.mxu0 0.0
      %867 = vmatprep.subr.mxu0 0.0
      %868 = vmatpush1.msra.mxu0 0.0
      %869 = vmatprep.subr.mxu0 0.0
      %870 = vmatpush1.msra.mxu0 0.0
      %871 = vmatprep.subr.mxu0 0.0
      %872 = vmatpush1.msra.mxu0 0.0
      %873 = vmatprep.subr.mxu0 0.0
      %874 = vmatpush1.msra.mxu0 0.0
      %875 = vmatprep.subr.mxu0 0.0
      %876 = vmatpush1.msra.mxu0 0.0
      %877 = vmatprep.subr.mxu0 0.0
      %878 = vmatpush1.msra.mxu0 0.0
      %879 = vmatprep.subr.mxu0 0.0
      %880 = vmatpush1.msra.mxu0 0.0
      %881 = vmatprep.subr.mxu0 0.0
      %882 = vmatpush1.msra.mxu0 0.0
      %883 = vmatprep.subr.mxu0 0.0
      %884 = vmatpush1.msra.mxu0 0.0
      %885 = vmatprep.subr.mxu0 0.0
      %886 = vmatpush1.msra.mxu0 0.0
      %887 = vmatprep.subr.mxu0 0.0
      %888 = vmatpush1.msra.mxu0 0.0
      %889 = vmatprep.subr.mxu0 0.0
      %890 = vmatpush1.msra.mxu0 0.0
      %891 = vmatprep.mubr.f32.mxu0 0.0
      %892 = vmatmul.mubr.f32.gmra.mrb[0].mxu0 %v803
      %v893 = vpop.f32.mrb[0].mxu0
      %v894 = vadd.f32 %v825, %v893
      %v895 = vpop.f32.mrb[0].mxu0
      %896 = vdwg.mxu0
      %897 = vst [vmem:[#allocation5] sm:$0x3] %v894
    $region57: #{two_head_forward.1} parent=1 // pred_fallthru
      _
    // Predicated region
    $region58: #{two_head_forward.1} parent=1 // pred_check
      _
    $region59: #{two_head_forward.1} parent=1 // pred_check_branch
      %899 = sbr.rel (0) target = $region61
    $region60: #{two_head_forward.1} parent=1 // pred_region
      %s901 = ssub.s32 32, 32
      %902 = vsyncadd [#allocation4], %s901
      %s904 = sshll.u32 [#allocation3], 4
      %s905 = int_to_ptr.vmem [resolvable:$true] %s904
      %907 = dma.vmem_to_hbm [thread:$0]  %s905, 32, %s13, [#allocation4]
    $region61: #{two_head_forward.1} parent=1 // pred_fallthru
      _
    // Predicated region
    $region62: #{two_head_forward.1} parent=1 // pred_check
      _
    $region63: #{two_head_forward.1} parent=1 // pred_check_branch
      %909 = sbr.rel (0) target = $region65
    $region64: #{two_head_forward.1} parent=1 // pred_region
      %s911 = ssub.s32 32, 32
      %912 = vsyncadd [#allocation6], %s911
      %s914 = sshll.u32 [#allocation5], 4
      %s915 = int_to_ptr.vmem [resolvable:$true] %s914
      %917 = dma.vmem_to_hbm [thread:$0]  %s915, 32, %s14, [#allocation6]
    $region65: #{two_head_forward.1} parent=1 // pred_fallthru
      _
    // Predicated region
    $region66: #{two_head_forward.1} parent=1 // pred_check
      _
    $region67: #{two_head_forward.1} parent=1 // pred_check_branch
      %919 = sbr.rel (0) target = $region69
    $region68: #{two_head_forward.1} parent=1 // pred_region
      %920 = dma.done [#allocation4], 32
    $region69: #{two_head_forward.1} parent=1 // pred_fallthru
      _
    // Predicated region
    $region70: #{two_head_forward.1} parent=1 // pred_check
      _
    $region71: #{two_head_forward.1} parent=1 // pred_check_branch
      %922 = sbr.rel (0) target = $region73
    $region72: #{two_head_forward.1} parent=1 // pred_region
      %923 = dma.done [#allocation6], 32
    $region73: #{two_head_forward.1} parent=1 // pred_fallthru
      _
    %924 = vsyncpa [#allocation4], 1
    %925 = vsyncpa [#allocation6], 1

</llo_original>
